<compile_context>
chip_gen: v7x
topology: tpu7x:2x2x1
jax: 0.10.0
libtpu: 0.0.40
codegen_flags: <defaults>
</compile_context>

<pallas_src>
import jax
import jax.numpy as jnp
from jax.experimental import pallas as pl
from jax.experimental.pallas import tpu as pltpu

# Target bytes moved per array (both channels) per grid step.  ~2 MiB blocks
# sit near the HBM roofline while 3 arrays x 2 pipeline buffers (~12 MiB)
# stay inside the scoped-VMEM default on every generation
# (v5e 16 MiB, v6e 32 MiB, v7x 32 MiB of 64 MiB physical).
_TARGET_BLOCK_BYTES = 2 * 1024 * 1024

# Per-array byte threshold below which a standalone Pallas call is pure
# launch overhead; compute with jnp (XLA fuses it) instead.
_FAST_PATH_BYTES = 32 * 1024

# Keep at least this many total grid steps when the shape allows it
# (v7x megacore sharding + DMA/compute pipelining).
_MIN_TOTAL_STEPS = 4


def _mask_kernel(mask_ref, spec_ref, out_ref):
    # Refs are (2, TILE_ROWS, LANES): channel 0 = real, channel 1 = imag.
    # Each per-channel slab is sublane-dense (TILE_ROWS % 8 == 0 or full
    # extent) and lane-dense, so loads and stores are unmasked full slabs.
    m_r = mask_ref[0]
    m_i = mask_ref[1]
    s_r = spec_ref[0]
    s_i = spec_ref[1]
    out_ref[0] = s_r * m_r - s_i * m_i   # enhanced real
    out_ref[1] = s_i * m_r + s_r * m_i   # enhanced imag


def _reference_jnp(mask, spec):
    s_real = spec[:, 0] * mask[:, 0] - spec[:, 1] * mask[:, 1]
    s_imag = spec[:, 1] * mask[:, 0] + spec[:, 0] * mask[:, 1]
    return jnp.stack([s_real, s_imag], axis=1)


def _choose_tile_rows(rows: int, lanes: int, itemsize: int, batch: int) -> int:
    """Rows per block: ~_TARGET_BLOCK_BYTES per array, multiple of 8 (or full)."""
    bytes_per_row = 2 * lanes * itemsize            # both channels
    tile = max(1, _TARGET_BLOCK_BYTES // bytes_per_row)
    tile = min(tile, rows)
    if tile < rows:
        tile = max(8, (tile // 8) * 8)              # sublane-dense block
    # Split further (if rows allow it) so batch * n_tiles >= _MIN_TOTAL_STEPS.
    min_tiles = -(-_MIN_TOTAL_STEPS // batch)       # ceil(4 / batch)
    if pl.cdiv(rows, tile) < min_tiles and rows >= 8 * min_tiles:
        tile = max(8, (rows // min_tiles) // 8 * 8)
    return tile


def complex_ratio_mask(mask: jax.Array, spec: jax.Array) -> jax.Array:
    """Apply a complex ratio mask to a spectrogram.

    Args:
        mask: (B, 2, T, F) float array.
        spec: (B, 2, T, F) float array.
    Returns:
        (B, 2, T, F) enhanced spectrogram.
    """
    assert mask.shape == spec.shape
    assert mask.dtype == spec.dtype
    B, C, T, F = mask.shape
    assert C == 2
    itemsize = jnp.dtype(spec.dtype).itemsize

    # Tiny-input fast path: a standalone HBM-bound Pallas call on a few KiB is
    # dominated by launch + per-step overhead.
    # TODO(synk): for production, fuse this elementwise complex multiply into
    # the producing/consuming kernel to save the standalone HBM round trip.
    if 2 * T * F * itemsize <= _FAST_PATH_BYTES:
        return _reference_jnp(mask, spec)

    # Pick a sublane/lane-dense 2-D view of (T, F) per channel:
    #  * F >= 128 (incl. ragged F=257): keep (T, F); lane dim is the full F
    #    extent (legal even if not a multiple of 128), rows tile along T.
    #  * F < 128 but T*F % 128 == 0: free contiguous reshape to
    #    (T*F//128, 128) so lanes are fully packed (no F->128 lane padding).
    #  * otherwise: keep (T, F) (lane-padded but still sublane-dense).
    if F < 128 and (T * F) % 128 == 0:
        rows, lanes = (T * F) // 128, 128
    else:
        rows, lanes = T, F
    x_mask = mask.reshape(B, 2, rows, lanes)
    x_spec = spec.reshape(B, 2, rows, lanes)

    tile_rows = _choose_tile_rows(rows, lanes, itemsize, B)
    n_tiles = pl.cdiv(rows, tile_rows)

    blk = (pl.Squeezed(), 2, tile_rows, lanes)
    idx = lambda b, r: (b, 0, r, 0)

    # VMEM budget: 3 arrays x 2 pipeline buffers of the (padded) block, plus
    # slack; clamp to [v5e default, v7x default] so we never over-request.
    pad_rows = -(-tile_rows // 8) * 8
    pad_lanes = -(-lanes // 128) * 128
    block_bytes = 2 * pad_rows * pad_lanes * itemsize
    vmem_limit = int(min(32 * 1024 * 1024,
                         max(16 * 1024 * 1024,
                             3 * 2 * block_bytes + 4 * 1024 * 1024)))

    flops = 6 * B * T * F                             # 4 mul + 2 add per bin
    bytes_accessed = 3 * B * 2 * T * F * itemsize     # 2 reads + 1 write

    out = pl.pallas_call(
        _mask_kernel,
        out_shape=jax.ShapeDtypeStruct((B, 2, rows, lanes), spec.dtype),
        grid_spec=pltpu.PrefetchScalarGridSpec(
            num_scalar_prefetch=0,
            grid=(B, n_tiles),
            in_specs=[
                pl.BlockSpec(blk, idx),      # mask
                pl.BlockSpec(blk, idx),      # spec
            ],
            out_specs=pl.BlockSpec(blk, idx),
        ),
        compiler_params=pltpu.CompilerParams(
            # Both grid axes are independent -> shard across megacore TCs.
            dimension_semantics=("parallel", "parallel"),
            vmem_limit_bytes=vmem_limit,
        ),
        cost_estimate=pl.CostEstimate(
            flops=flops, transcendentals=0, bytes_accessed=bytes_accessed),
    )(x_mask, x_spec)

    return out.reshape(B, 2, T, F)


def _check(key, B, T, F):
    k_mask, k_spec = jax.random.split(key)
    mask = jax.random.normal(k_mask, (B, 2, T, F), dtype=jnp.float32)
    spec = jax.random.normal(k_spec, (B, 2, T, F), dtype=jnp.float32)
    out = complex_ratio_mask(mask, spec)
    jax.block_until_ready(out)
    ref = _reference_jnp(mask, spec)
    assert out.shape == (B, 2, T, F)
    assert jnp.allclose(out, ref, atol=1e-5, rtol=1e-5)


if __name__ == "__main__":
    key = jax.random.PRNGKey(0)
    k0, k1, k2, k3 = jax.random.split(key, 4)

    # Tiny shape matching the module layout: wrapper fast path (jnp).
    _check(k0, B=2, T=8, F=16)
    # GTCRN-like odd frequency count (F=257): 4-D (T, F) block, ragged rows.
    _check(k1, B=1, T=63, F=257)
    # F < 128 with T*F % 128 == 0: flattened (rows, 128) lane-dense path.
    _check(k2, B=2, T=64, F=64)
    # Wide F, multi-row-tile pipelined grid path.
    _check(k3, B=1, T=128, F=256)

    print("KERNEL_OK")
</pallas_src>

<mosaic_0001>
module attributes {stable_mosaic.version = 11 : i64} {
  func.func @_mask_kernel(%arg0: i32, %arg1: i32, %arg2: memref<1x2x8x257xf32, #tpu.memory_space<vmem>>, %arg3: memref<1x2x8x257xf32, #tpu.memory_space<vmem>>, %arg4: memref<1x2x8x257xf32, #tpu.memory_space<vmem>>) attributes {dimension_semantics = [#tpu.dimension_semantics<parallel>, #tpu.dimension_semantics<parallel>], iteration_bounds = array<i64: 1, 8>, scalar_prefetch = 0 : i64, scratch_operands = 0 : i64, tpu.core_type = #tpu.core_type<tc>, window_params = [{transform_indices = @transform_0, window_bounds = array<i64: 1, 2, 8, 257>}, {transform_indices = @transform_1, window_bounds = array<i64: 1, 2, 8, 257>}, {transform_indices = @transform_2, window_bounds = array<i64: 1, 2, 8, 257>}]} {
    %c0 = arith.constant 0 : index
    %c0_0 = arith.constant 0 : index
    %c0_1 = arith.constant 0 : index
    %c0_2 = arith.constant 0 : index
    %0 = vector.load %arg2[%c0, %c0_0, %c0_1, %c0_2] : memref<1x2x8x257xf32, #tpu.memory_space<vmem>>, vector<1x1x8x257xf32>
    %1 = vector.shape_cast %0 : vector<1x1x8x257xf32> to vector<8x257xf32>
    %c0_3 = arith.constant 0 : index
    %c1 = arith.constant 1 : index
    %c0_4 = arith.constant 0 : index
    %c0_5 = arith.constant 0 : index
    %2 = vector.load %arg2[%c0_3, %c1, %c0_4, %c0_5] : memref<1x2x8x257xf32, #tpu.memory_space<vmem>>, vector<1x1x8x257xf32>
    %3 = vector.shape_cast %2 : vector<1x1x8x257xf32> to vector<8x257xf32>
    %c0_6 = arith.constant 0 : index
    %c0_7 = arith.constant 0 : index
    %c0_8 = arith.constant 0 : index
    %c0_9 = arith.constant 0 : index
    %4 = vector.load %arg3[%c0_6, %c0_7, %c0_8, %c0_9] : memref<1x2x8x257xf32, #tpu.memory_space<vmem>>, vector<1x1x8x257xf32>
    %5 = vector.shape_cast %4 : vector<1x1x8x257xf32> to vector<8x257xf32>
    %c0_10 = arith.constant 0 : index
    %c1_11 = arith.constant 1 : index
    %c0_12 = arith.constant 0 : index
    %c0_13 = arith.constant 0 : index
    %6 = vector.load %arg3[%c0_10, %c1_11, %c0_12, %c0_13] : memref<1x2x8x257xf32, #tpu.memory_space<vmem>>, vector<1x1x8x257xf32>
    %7 = vector.shape_cast %6 : vector<1x1x8x257xf32> to vector<8x257xf32>
    %8 = arith.mulf %5, %1 : vector<8x257xf32>
    %9 = arith.mulf %7, %3 : vector<8x257xf32>
    %10 = arith.subf %8, %9 : vector<8x257xf32>
    %c0_14 = arith.constant 0 : index
    %c0_15 = arith.constant 0 : index
    %c0_16 = arith.constant 0 : index
    %c0_17 = arith.constant 0 : index
    %11 = vector.load %arg4[%c0_14, %c0_15, %c0_16, %c0_17] : memref<1x2x8x257xf32, #tpu.memory_space<vmem>>, vector<1x1x8x257xf32>
    %12 = vector.shape_cast %11 : vector<1x1x8x257xf32> to vector<8x257xf32>
    %13 = vector.shape_cast %10 : vector<8x257xf32> to vector<1x1x8x257xf32>
    tpu.vector_store %arg4[%c0_14, %c0_15, %c0_16, %c0_17], %13 {strides = array<i32>} : memref<1x2x8x257xf32, #tpu.memory_space<vmem>>, vector<1x1x8x257xf32>,
    %14 = arith.mulf %7, %1 : vector<8x257xf32>
    %15 = arith.mulf %5, %3 : vector<8x257xf32>
    %16 = arith.addf %14, %15 : vector<8x257xf32>
    %c0_18 = arith.constant 0 : index
    %c1_19 = arith.constant 1 : index
    %c0_20 = arith.constant 0 : index
    %c0_21 = arith.constant 0 : index
    %17 = vector.load %arg4[%c0_18, %c1_19, %c0_20, %c0_21] : memref<1x2x8x257xf32, #tpu.memory_space<vmem>>, vector<1x1x8x257xf32>
    %18 = vector.shape_cast %17 : vector<1x1x8x257xf32> to vector<8x257xf32>
    %19 = vector.shape_cast %16 : vector<8x257xf32> to vector<1x1x8x257xf32>
    tpu.vector_store %arg4[%c0_18, %c1_19, %c0_20, %c0_21], %19 {strides = array<i32>} : memref<1x2x8x257xf32, #tpu.memory_space<vmem>>, vector<1x1x8x257xf32>,
    return
  }
  func.func @transform_0(%arg0: i32, %arg1: i32) -> (i32, i32, i32, i32) {
    %c0_i32 = arith.constant 0 : i32
    %c0_i32_0 = arith.constant 0 : i32
    %c0_i32_1 = arith.constant 0 : i32
    return %arg0, %c0_i32, %arg1, %c0_i32_0 : i32, i32, i32, i32
  }
  func.func @transform_1(%arg0: i32, %arg1: i32) -> (i32, i32, i32, i32) {
    %c0_i32 = arith.constant 0 : i32
    %c0_i32_0 = arith.constant 0 : i32
    %c0_i32_1 = arith.constant 0 : i32
    return %arg0, %c0_i32, %arg1, %c0_i32_0 : i32, i32, i32, i32
  }
  func.func @transform_2(%arg0: i32, %arg1: i32) -> (i32, i32, i32, i32) {
    %c0_i32 = arith.constant 0 : i32
    %c0_i32_0 = arith.constant 0 : i32
    %c0_i32_1 = arith.constant 0 : i32
    return %arg0, %c0_i32, %arg1, %c0_i32_0 : i32, i32, i32, i32
  }
}

</mosaic_0001>

<llo_original>
// kernel: tpu_custom_call.1
$region0: #{tpu_custom_call.1}
  #allocation0 [shape = 'u32[]', space=smem, size = 0x4, offset = 0x4, fixed_abs, tag = 'smem constant byte address 0x4 - core index']
  #allocation1 [shape = 'u32[144,128]{1,0:T(1,128)}', space=vmem, size = 0x12000, scoped, tag = 'internal scratch']
  %s0 = inlined_call_operand.vmem [shape: f32[1,2,63,257], index: 0, kind: input, shape index: {}]
  %s1 = inlined_call_operand.vmem [shape: f32[1,2,63,257], index: 1, kind: input, shape index: {}]
  %s2 = inlined_call_operand.vmem [shape: f32[1,2,63,257], index: 2, kind: output, shape index: {}]
  %s3 = sld [smem:[#allocation0]]
  $region106: #{tpu_custom_call.1} parent=0
    _
  %s5 = ssub.s32 1, %s3
  %s6 = scalar_select 0, %s5, %s3
  $region1: #{tpu_custom_call.1} parent=0
    #allocation2 [shape = 'u8[49152]{0}', space=vmem, size = 0xc000, scoped, tag = 'input window, operand 0']
    #allocation3 [shape = 'u8[49152]{0}', space=vmem, size = 0xc000, scoped, tag = 'input window, operand 1']
    #allocation4 [shape = 'u8[49152]{0}', space=vmem, size = 0xc000, scoped, tag = 'output window, operand 0']
    loop: start=0, step=1, limit=10
    $region2: #{tpu_custom_call.1} parent=1 // loop_pre_header
      _
    $region3: #{tpu_custom_call.1} parent=1 // loop_header
      %s8 = sphi 0, %s12
      %p9 = scmp.ge.s32.totalorder %s8, 10
      %s15 = sphi 0, %s27
      %s16 = sphi 0, %s23
      %s17 = sphi 0, %s15
      %s18 = sphi 0, %s16
      %s19 = sphi 0, %s17
      %s20 = sphi 0, %s18
      %s32 = sphi 0, %s34
      %s35 = sphi 0, %s32
      %s36 = sphi 0, %s35
      %s52 = sphi 0, %s36
      %s60 = sphi 0, %s62
      %s63 = sphi 0, %s60
      %s64 = sphi 0, %s63
      %s80 = sphi 0, %s64
      %s88 = sphi 0, %s90
      %s91 = sphi 0, %s88
      %s92 = sphi 0, %s91
      %s108 = sphi 0, %s92
    $region4: #{tpu_custom_call.1} parent=1 // loop_header_branch
      %11 = sbr.rel (%p9) target = $region8
    $region5: #{tpu_custom_call.1} parent=1 // loop_body
      %s13 = ssub.s32 %s8, 1
      %s14 = ssub.s32 %s8, 2
      %s21 = sadd.s32 1, %s16
      %p22 = scmp.ge.s32.totalorder %s21, 8
      %s23 = scalar_select %p22, 0, %s21
      %s24 = sadd.s32 1, %s15
      %s25 = scalar_select %p22, %s24, %s15
      %p26 = scmp.ge.s32.totalorder %s25, 1
      %s27 = scalar_select %p26, 0, %s25
      %s28 = ssub.s32 %s15, %s27
      %s29 = ssub.s32 %s16, %s23
      %s30 = sor.u32 %s28, %s29
      %p31 = scmp.eq.s32.totalorder %s30, 0
      %s33 = sadd.s32 %s32, 1
      %s34 = scalar_select %p31, %s32, %s33
      %p37 = pneg %p31
      %p38 = scmp.eq.s32.totalorder %s8, 7
      %p39 = por %p37, %p38
      %p40 = scmp.ne.s32.totalorder %s32, %s35
      %p41 = scmp.eq.s32.totalorder %s8, 0
      %p42 = por %p40, %p41
      %p43 = scmp.ne.s32.totalorder %s32, %s35
      %p44 = scmp.eq.s32.totalorder %s13, 7
      %p45 = por %p43, %p44
      %p46 = scmp.ne.s32.totalorder %s35, %s36
      %p47 = scmp.eq.s32.totalorder %s13, 0
      %p48 = por %p46, %p47
      %p49 = scmp.ne.s32.totalorder %s35, %s36
      %p50 = scmp.eq.s32.totalorder %s14, 7
      %p51 = por %p49, %p50
      %p53 = scmp.ne.s32.totalorder %s36, %s52
      %p54 = scmp.eq.s32.totalorder %s14, 0
      %p55 = por %p53, %p54
      %s56 = ssub.s32 %s15, %s27
      %s57 = ssub.s32 %s16, %s23
      %s58 = sor.u32 %s56, %s57
      %p59 = scmp.eq.s32.totalorder %s58, 0
      %s61 = sadd.s32 %s60, 1
      %s62 = scalar_select %p59, %s60, %s61
      %p65 = pneg %p59
      %p66 = scmp.eq.s32.totalorder %s8, 7
      %p67 = por %p65, %p66
      %p68 = scmp.ne.s32.totalorder %s60, %s63
      %p69 = scmp.eq.s32.totalorder %s8, 0
      %p70 = por %p68, %p69
      %p71 = scmp.ne.s32.totalorder %s60, %s63
      %p72 = scmp.eq.s32.totalorder %s13, 7
      %p73 = por %p71, %p72
      %p74 = scmp.ne.s32.totalorder %s63, %s64
      %p75 = scmp.eq.s32.totalorder %s13, 0
      %p76 = por %p74, %p75
      %p77 = scmp.ne.s32.totalorder %s63, %s64
      %p78 = scmp.eq.s32.totalorder %s14, 7
      %p79 = por %p77, %p78
      %p81 = scmp.ne.s32.totalorder %s64, %s80
      %p82 = scmp.eq.s32.totalorder %s14, 0
      %p83 = por %p81, %p82
      %s84 = ssub.s32 %s15, %s27
      %s85 = ssub.s32 %s16, %s23
      %s86 = sor.u32 %s84, %s85
      %p87 = scmp.eq.s32.totalorder %s86, 0
      %s89 = sadd.s32 %s88, 1
      %s90 = scalar_select %p87, %s88, %s89
      %p93 = pneg %p87
      %p94 = scmp.eq.s32.totalorder %s8, 7
      %p95 = por %p93, %p94
      %p96 = scmp.ne.s32.totalorder %s88, %s91
      %p97 = scmp.eq.s32.totalorder %s8, 0
      %p98 = por %p96, %p97
      %p99 = scmp.ne.s32.totalorder %s88, %s91
      %p100 = scmp.eq.s32.totalorder %s13, 7
      %p101 = por %p99, %p100
      %p102 = scmp.ne.s32.totalorder %s91, %s92
      %p103 = scmp.eq.s32.totalorder %s13, 0
      %p104 = por %p102, %p103
      %p105 = scmp.ne.s32.totalorder %s91, %s92
      %p106 = scmp.eq.s32.totalorder %s14, 7
      %p107 = por %p105, %p106
      %p109 = scmp.ne.s32.totalorder %s92, %s108
      %p110 = scmp.eq.s32.totalorder %s14, 0
      %p111 = por %p109, %p110
      %p112 = scmp.le.s32.totalorder 1, %s8
      %p113 = scmp.lt.s32.totalorder %s8, 9
      %p114 = pnand %p112, %p113
      %p115 = pneg %p114
      // Predicated region
      $region9: #{tpu_custom_call.1} parent=5 // pred_check
        _
      $region10: #{tpu_custom_call.1} parent=5 // pred_check_branch
        %117 = sbr.rel (%p114) target = $region12
      $region11: #{tpu_custom_call.1} parent=5 // pred_region
        %s118 = ssub.s32 %s8, 1
      $region12: #{tpu_custom_call.1} parent=5 // pred_fallthru
        _
      %p119 = scmp.lt.s32.totalorder %s8, 8
      // Predicated region
      $region13: #{tpu_custom_call.1} parent=5 // pred_check
        %p120 = pneg %p119
      $region14: #{tpu_custom_call.1} parent=5 // pred_check_branch
        %122 = sbr.rel (%p120) target = $region16
      $region15: #{tpu_custom_call.1} parent=5 // pred_region
        // Predicated region
        $region17: #{tpu_custom_call.1} parent=15 // pred_check
          %p123 = pneg %p42
        $region18: #{tpu_custom_call.1} parent=15 // pred_check_branch
          %125 = sbr.rel (%p123) target = $region20
        $region19: #{tpu_custom_call.1} parent=15 // pred_region
          %s126 = sand.u32 %s32, 1
          %s127 = sand.u32 %s32, 1
          %s128 = smul.addr %s127, 48
          %s129 = scalar_lea.vmem [#allocation2], %s128
          %s130 = smul.addr %s16, 3
          %s131 = smul.addr %s15, 48
          %s132 = sadd.s32 %s130, %s131
          %s133 = smul.addr %s132, 8
          %s134 = scalar_lea.vmem %s0, %s133
          // Predicated region
          $region21: #{tpu_custom_call.1} parent=19 // pred_check
            _
          $region22: #{tpu_custom_call.1} parent=19 // pred_check_branch
            %136 = sbr.rel (0) target = $region24
          $region23: #{tpu_custom_call.1} parent=19 // pred_region
            // Predicated region
            $region25: #{tpu_custom_call.1} parent=23 // pred_check
              _
            $region26: #{tpu_custom_call.1} parent=23 // pred_check_branch
              %138 = sbr.rel (0) target = $region28
            $region27: #{tpu_custom_call.1} parent=23 // pred_region
              loop: start=0, step=1, limit=1
              $region29: #{tpu_custom_call.1} parent=27 // loop_pre_header
                _
              $region30: #{tpu_custom_call.1} parent=27 // loop_header
                %s140 = sphi 0, %s144
                %p141 = scmp.ge.s32.totalorder %s140, 1
                %s145 = sphi %s134, %s134
                %s146 = sphi %s129, %s129
              $region31: #{tpu_custom_call.1} parent=27 // loop_header_branch
                %143 = sbr.rel (%p141) target = $region35
              $region32: #{tpu_custom_call.1} parent=27 // loop_body
                %v147 = vld [vmem:[%s145] sm:$0xff]
                %148 = vst [vmem:[%s146] sm:$0xff] %v147
                %v149 = vld [vmem:[%s145 + $0x8] sm:$0xff]
                %150 = vst [vmem:[%s146 + $0x8] sm:$0xff] %v149
                %v151 = vld [vmem:[%s145 + $0x10] sm:$0xff]
                %152 = vst [vmem:[%s146 + $0x10] sm:$0xff] %v151
                %v153 = vld [vmem:[%s145 + $0xc0] sm:$0xff]
                %154 = vst [vmem:[%s146 + $0x18] sm:$0xff] %v153
                %v155 = vld [vmem:[%s145 + $0xc8] sm:$0xff]
                %156 = vst [vmem:[%s146 + $0x20] sm:$0xff] %v155
                %v157 = vld [vmem:[%s145 + $0xd0] sm:$0xff]
                %158 = vst [vmem:[%s146 + $0x28] sm:$0xff] %v157
              $region33: #{tpu_custom_call.1} parent=27 // loop_footer
                %s144 = sadd.s32 1, %s140
              $region34: #{tpu_custom_call.1} parent=27 // loop_footer_branch
                %139 = sbr.rel target = $region30
              $region35: #{tpu_custom_call.1} parent=27 // loop_exit
                _
            $region28: #{tpu_custom_call.1} parent=23 // pred_fallthru
              _
            // Predicated region
            $region36: #{tpu_custom_call.1} parent=23 // pred_check
              _
            $region37: #{tpu_custom_call.1} parent=23 // pred_check_branch
              %160 = sbr.rel target = $region39
            $region38: #{tpu_custom_call.1} parent=23 // pred_region
              _
            $region39: #{tpu_custom_call.1} parent=23 // pred_fallthru
              _
          $region24: #{tpu_custom_call.1} parent=19 // pred_fallthru
            _
          %161 = vnop
        $region20: #{tpu_custom_call.1} parent=15 // pred_fallthru
          _
        // Predicated region
        $region40: #{tpu_custom_call.1} parent=15 // pred_check
          %p162 = pneg %p70
        $region41: #{tpu_custom_call.1} parent=15 // pred_check_branch
          %164 = sbr.rel (%p162) target = $region43
        $region42: #{tpu_custom_call.1} parent=15 // pred_region
          %s165 = sand.u32 %s60, 1
          %s166 = sand.u32 %s60, 1
          %s167 = smul.addr %s166, 48
          %s168 = scalar_lea.vmem [#allocation3], %s167
          %s169 = smul.addr %s16, 3
          %s170 = smul.addr %s15, 48
          %s171 = sadd.s32 %s169, %s170
          %s172 = smul.addr %s171, 8
          %s173 = scalar_lea.vmem %s1, %s172
          // Predicated region
          $region44: #{tpu_custom_call.1} parent=42 // pred_check
            _
          $region45: #{tpu_custom_call.1} parent=42 // pred_check_branch
            %175 = sbr.rel (0) target = $region47
          $region46: #{tpu_custom_call.1} parent=42 // pred_region
            // Predicated region
            $region48: #{tpu_custom_call.1} parent=46 // pred_check
              _
            $region49: #{tpu_custom_call.1} parent=46 // pred_check_branch
              %177 = sbr.rel (0) target = $region51
            $region50: #{tpu_custom_call.1} parent=46 // pred_region
              loop: start=0, step=1, limit=1
              $region52: #{tpu_custom_call.1} parent=50 // loop_pre_header
                _
              $region53: #{tpu_custom_call.1} parent=50 // loop_header
                %s179 = sphi 0, %s183
                %p180 = scmp.ge.s32.totalorder %s179, 1
                %s184 = sphi %s173, %s173
                %s185 = sphi %s168, %s168
              $region54: #{tpu_custom_call.1} parent=50 // loop_header_branch
                %182 = sbr.rel (%p180) target = $region58
              $region55: #{tpu_custom_call.1} parent=50 // loop_body
                %v186 = vld [vmem:[%s184] sm:$0xff]
                %187 = vst [vmem:[%s185] sm:$0xff] %v186
                %v188 = vld [vmem:[%s184 + $0x8] sm:$0xff]
                %189 = vst [vmem:[%s185 + $0x8] sm:$0xff] %v188
                %v190 = vld [vmem:[%s184 + $0x10] sm:$0xff]
                %191 = vst [vmem:[%s185 + $0x10] sm:$0xff] %v190
                %v192 = vld [vmem:[%s184 + $0xc0] sm:$0xff]
                %193 = vst [vmem:[%s185 + $0x18] sm:$0xff] %v192
                %v194 = vld [vmem:[%s184 + $0xc8] sm:$0xff]
                %195 = vst [vmem:[%s185 + $0x20] sm:$0xff] %v194
                %v196 = vld [vmem:[%s184 + $0xd0] sm:$0xff]
                %197 = vst [vmem:[%s185 + $0x28] sm:$0xff] %v196
              $region56: #{tpu_custom_call.1} parent=50 // loop_footer
                %s183 = sadd.s32 1, %s179
              $region57: #{tpu_custom_call.1} parent=50 // loop_footer_branch
                %178 = sbr.rel target = $region53
              $region58: #{tpu_custom_call.1} parent=50 // loop_exit
                _
            $region51: #{tpu_custom_call.1} parent=46 // pred_fallthru
              _
            // Predicated region
            $region59: #{tpu_custom_call.1} parent=46 // pred_check
              _
            $region60: #{tpu_custom_call.1} parent=46 // pred_check_branch
              %199 = sbr.rel target = $region62
            $region61: #{tpu_custom_call.1} parent=46 // pred_region
              _
            $region62: #{tpu_custom_call.1} parent=46 // pred_fallthru
              _
          $region47: #{tpu_custom_call.1} parent=42 // pred_fallthru
            _
          %200 = vnop
        $region43: #{tpu_custom_call.1} parent=15 // pred_fallthru
          _
      $region16: #{tpu_custom_call.1} parent=5 // pred_fallthru
        _
      %p201 = scmp.le.s32.totalorder 1, %s8
      %p202 = scmp.lt.s32.totalorder %s8, 9
      %p203 = pnand %p201, %p202
      %p204 = pneg %p203
      // Predicated region
      $region63: #{tpu_custom_call.1} parent=5 // pred_check
        _
      $region64: #{tpu_custom_call.1} parent=5 // pred_check_branch
        %206 = sbr.rel (%p203) target = $region66
      $region65: #{tpu_custom_call.1} parent=5 // pred_region
        %s207 = ssub.s32 %s8, 1
        %s208 = sand.u32 %s35, 1
        %s209 = sand.u32 %s35, 1
        %s210 = smul.addr %s209, 48
        %s211 = scalar_lea.vmem [#allocation2], %s210
        // Predicated region
        $region67: #{tpu_custom_call.1} parent=65 // pred_check
          %p212 = pneg %p48
        $region68: #{tpu_custom_call.1} parent=65 // pred_check_branch
          %214 = sbr.rel (%p212) target = $region70
        $region69: #{tpu_custom_call.1} parent=65 // pred_region
          _
        $region70: #{tpu_custom_call.1} parent=65 // pred_fallthru
          _
        %s215 = sand.u32 %s63, 1
        %s216 = sand.u32 %s63, 1
        %s217 = smul.addr %s216, 48
        %s218 = scalar_lea.vmem [#allocation3], %s217
        // Predicated region
        $region71: #{tpu_custom_call.1} parent=65 // pred_check
          %p219 = pneg %p76
        $region72: #{tpu_custom_call.1} parent=65 // pred_check_branch
          %221 = sbr.rel (%p219) target = $region74
        $region73: #{tpu_custom_call.1} parent=65 // pred_region
          _
        $region74: #{tpu_custom_call.1} parent=65 // pred_fallthru
          _
        %s222 = sand.u32 %s35, 1
        %s223 = sand.u32 %s35, 1
        %s224 = smul.addr %s223, 48
        %s225 = scalar_lea.vmem [#allocation2], %s224
        %p226 = pneg %p48
        %p227 = pneg %p45
        %s228 = sand.u32 %s63, 1
        %s229 = sand.u32 %s63, 1
        %s230 = smul.addr %s229, 48
        %s231 = scalar_lea.vmem [#allocation3], %s230
        %p232 = pneg %p76
        %p233 = pneg %p73
        %p234 = pneg %p104
        %p235 = pneg %p101
        %s236 = sand.u32 %s91, 1
        %s237 = sand.u32 %s91, 1
        %s238 = smul.addr %s237, 48
        %s239 = scalar_lea.vmem [#allocation4], %s238
        %v240 = vld [vmem:[%s211] sm:$0xff]
        %v241 = vld [vmem:[%s211 + $0x8] sm:$0xff]
        %v242 = vld [vmem:[%s211 + $0x10] sm:$0xff]
        %s243 = scalar_lea.vmem %s211, 24 [#allocation2]
        %v244 = vld [vmem:[%s243] sm:$0xff]
        %v245 = vld [vmem:[%s243 + $0x8] sm:$0xff]
        %v246 = vld [vmem:[%s243 + $0x10] sm:$0xff]
        %v247 = vld [vmem:[%s218] sm:$0xff]
        %v248 = vld [vmem:[%s218 + $0x8] sm:$0xff]
        %v249 = vld [vmem:[%s218 + $0x10] sm:$0xff]
        %s250 = scalar_lea.vmem %s218, 24 [#allocation3]
        %v251 = vld [vmem:[%s250] sm:$0xff]
        %v252 = vld [vmem:[%s250 + $0x8] sm:$0xff]
        %v253 = vld [vmem:[%s250 + $0x10] sm:$0xff]
        %v254 = vmul.f32 %v247, %v240
        %v255 = vmul.f32 %v248, %v241
        %v256 = vmul.f32 %v249, %v242
        %v257 = vmul.f32 %v251, %v244
        %v258 = vmul.f32 %v252, %v245
        %v259 = vmul.f32 %v253, %v246
        %v260 = vsub.f32 %v254, %v257
        %v261 = vsub.f32 %v255, %v258
        %v262 = vsub.f32 %v256, %v259
        %263 = vst [vmem:[%s239] sm:$0xff] %v260
        %264 = vst [vmem:[%s239 + $0x8] sm:$0xff] %v261
        %vm265 = vcmask 7168
        %266 = vst.msk [vmem:[%s239 + $0x10] sm:$0xff] %vm265, %v262
        %v267 = vmul.f32 %v251, %v240
        %v268 = vmul.f32 %v252, %v241
        %v269 = vmul.f32 %v253, %v242
        %v270 = vmul.f32 %v247, %v244
        %v271 = vmul.f32 %v248, %v245
        %v272 = vmul.f32 %v249, %v246
        %v273 = vadd.f32 %v267, %v270
        %v274 = vadd.f32 %v268, %v271
        %v275 = vadd.f32 %v269, %v272
        %s276 = scalar_lea.vmem %s239, 24 [#allocation4]
        %277 = vst [vmem:[%s276] sm:$0xff] %v273
        %278 = vst [vmem:[%s276 + $0x8] sm:$0xff] %v274
        %279 = vst.msk [vmem:[%s276 + $0x10] sm:$0xff] %vm265, %v275
        %s280 = sand.u32 %s91, 1
        %s281 = sand.u32 %s91, 1
        %s282 = smul.addr %s281, 48
        %s283 = scalar_lea.vmem [#allocation4], %s282
        // Predicated region
        $region75: #{tpu_custom_call.1} parent=65 // pred_check
          %p284 = pneg %p101
        $region76: #{tpu_custom_call.1} parent=65 // pred_check_branch
          %286 = sbr.rel (%p284) target = $region78
        $region77: #{tpu_custom_call.1} parent=65 // pred_region
          %s287 = smul.addr %s18, 3
          %s288 = smul.addr %s17, 48
          %s289 = sadd.s32 %s287, %s288
          %s290 = smul.addr %s289, 8
          %s291 = scalar_lea.vmem %s2, %s290
          // Predicated region
          $region79: #{tpu_custom_call.1} parent=77 // pred_check
            _
          $region80: #{tpu_custom_call.1} parent=77 // pred_check_branch
            %293 = sbr.rel (0) target = $region82
          $region81: #{tpu_custom_call.1} parent=77 // pred_region
            // Predicated region
            $region83: #{tpu_custom_call.1} parent=81 // pred_check
              _
            $region84: #{tpu_custom_call.1} parent=81 // pred_check_branch
              %295 = sbr.rel (0) target = $region86
            $region85: #{tpu_custom_call.1} parent=81 // pred_region
              loop: start=0, step=1, limit=1
              $region87: #{tpu_custom_call.1} parent=85 // loop_pre_header
                _
              $region88: #{tpu_custom_call.1} parent=85 // loop_header
                %s297 = sphi 0, %s301
                %p298 = scmp.ge.s32.totalorder %s297, 1
                %s302 = sphi %s283, %s283
                %s303 = sphi %s291, %s291
              $region89: #{tpu_custom_call.1} parent=85 // loop_header_branch
                %300 = sbr.rel (%p298) target = $region93
              $region90: #{tpu_custom_call.1} parent=85 // loop_body
                %v304 = vld [vmem:[%s302] sm:$0xff]
                %305 = vst [vmem:[%s303] sm:$0xff] %v304
                %v306 = vld [vmem:[%s302 + $0x8] sm:$0xff]
                %307 = vst [vmem:[%s303 + $0x8] sm:$0xff] %v306
                %v308 = vld [vmem:[%s302 + $0x10] sm:$0xff]
                %309 = vst [vmem:[%s303 + $0x10] sm:$0xff] %v308
                %v310 = vld [vmem:[%s302 + $0x18] sm:$0xff]
                %311 = vst [vmem:[%s303 + $0xc0] sm:$0xff] %v310
                %v312 = vld [vmem:[%s302 + $0x20] sm:$0xff]
                %313 = vst [vmem:[%s303 + $0xc8] sm:$0xff] %v312
                %v314 = vld [vmem:[%s302 + $0x28] sm:$0xff]
                %315 = vst [vmem:[%s303 + $0xd0] sm:$0xff] %v314
              $region91: #{tpu_custom_call.1} parent=85 // loop_footer
                %s301 = sadd.s32 1, %s297
              $region92: #{tpu_custom_call.1} parent=85 // loop_footer_branch
                %296 = sbr.rel target = $region88
              $region93: #{tpu_custom_call.1} parent=85 // loop_exit
                _
            $region86: #{tpu_custom_call.1} parent=81 // pred_fallthru
              _
            // Predicated region
            $region94: #{tpu_custom_call.1} parent=81 // pred_check
              _
            $region95: #{tpu_custom_call.1} parent=81 // pred_check_branch
              %317 = sbr.rel target = $region97
            $region96: #{tpu_custom_call.1} parent=81 // pred_region
              _
            $region97: #{tpu_custom_call.1} parent=81 // pred_fallthru
              _
          $region82: #{tpu_custom_call.1} parent=77 // pred_fallthru
            _
          %318 = vnop
        $region78: #{tpu_custom_call.1} parent=65 // pred_fallthru
          _
      $region66: #{tpu_custom_call.1} parent=5 // pred_fallthru
        _
      %p319 = scmp.le.s32.totalorder 2, %s8
      // Predicated region
      $region98: #{tpu_custom_call.1} parent=5 // pred_check
        %p320 = pneg %p319
      $region99: #{tpu_custom_call.1} parent=5 // pred_check_branch
        %322 = sbr.rel (%p320) target = $region101
      $region100: #{tpu_custom_call.1} parent=5 // pred_region
        %s323 = ssub.s32 %s8, 2
        // Predicated region
        $region102: #{tpu_custom_call.1} parent=100 // pred_check
          %p324 = pneg %p107
        $region103: #{tpu_custom_call.1} parent=100 // pred_check_branch
          %326 = sbr.rel (%p324) target = $region105
        $region104: #{tpu_custom_call.1} parent=100 // pred_region
          %s327 = sand.u32 %s92, 1
          %s328 = sand.u32 %s92, 1
          %s329 = smul.addr %s328, 48
          %s330 = scalar_lea.vmem [#allocation4], %s329
        $region105: #{tpu_custom_call.1} parent=100 // pred_fallthru
          _
      $region101: #{tpu_custom_call.1} parent=5 // pred_fallthru
        _
    $region6: #{tpu_custom_call.1} parent=1 // loop_footer
      %s12 = sadd.s32 1, %s8
    $region7: #{tpu_custom_call.1} parent=1 // loop_footer_branch
      %7 = sbr.rel target = $region3
    $region8: #{tpu_custom_call.1} parent=1 // loop_exit
      _

</llo_original>
